<compile_context>
chip_gen: v5e
topology: v5e:2x2
jax: 0.10.0
libtpu: 0.0.40
codegen_flags: <defaults>
</compile_context>

<pallas_src>
import functools

import jax
import jax.numpy as jnp
from jax.experimental import pallas as pl
from jax.experimental.pallas import tpu as pltpu


def _random_model_kernel(mask_ref, x_ref, rand_ref, o_ref, *, num_channels, plane):
    # mask_ref: VMEM [1,  plane]               f32 (1 inside interior, 0 on border)
    # x_ref   : VMEM [bt, num_channels*plane]  f32 (flattened [C, H, W] per row)
    # rand_ref: VMEM [bt, plane]               f32 uniform [0, 1)
    # o_ref   : VMEM [bt, plane]               f32 (full padded plane; border
    #                                               columns are discarded by the wrapper)
    x = x_ref[...]

    # Channel reduction as unrolled, lane-aligned (multiples of 256 = 2*128) adds.
    ch_sum = x[:, 0:plane]
    for c in range(1, num_channels):
        ch_sum = ch_sum + x[:, c * plane:(c + 1) * plane]

    # Border-mask multiply instead of an offset [1:-1, 1:-1] slice: keeps the
    # whole computation tile-aligned (single VPU op, no XLU relayout).
    x_sum = ch_sum * mask_ref[...]                      # [bt, plane]

    # Per-batch scalar exp(tanh((sum - 1) * 1000) * 10), kept as [bt, 1].
    total = jnp.sum(x_sum, axis=1, keepdims=True)
    factor = jnp.exp(jnp.tanh((total - 1.0) * 1000.0) * 10.0)

    # out = rand - (x_sum * factor - x_sum) = rand - x_sum * (factor - 1)
    o_ref[...] = rand_ref[...] - x_sum * (factor - 1.0)


def _cdiv(a, b):
    return -(-a // b)


def _round_up(n, m):
    return _cdiv(n, m) * m


def _pick_batch_tile(B, row_bytes, *, budget_bytes=16 * 1024 * 1024, min_grid=2):
    """Batch tile: multiple of 8 (sublane-dense), double-buffered blocks within
    `budget_bytes` (well under every generation's scoped-VMEM default, including
    v7x's 32 MiB), sized so the grid has ~min_grid steps."""
    max_bt = max(8, (budget_bytes // (2 * row_bytes)) // 8 * 8)
    bt = min(max_bt, _round_up(_cdiv(B, min_grid), 8))
    return bt


@functools.partial(jax.jit, static_argnames=("board_size", "batch_tile"))
def random_model_forward(x, key, *, board_size, batch_tile=None):
    """x: [B, C, board_size+2, board_size+2] f32 -> [B, board_size**2] f32."""
    B, C, H, W = x.shape
    bs = board_size
    assert H == bs + 2 and W == bs + 2
    HW = H * W

    row_bytes = 4 * (C * HW + 2 * HW)                   # x + rand + out per batch row
    bt = batch_tile if batch_tile is not None else _pick_batch_tile(B, row_bytes)
    # >= 2 grid steps so both v7x TensorCores get work; pad batch instead of
    # shrinking the tile for non-divisible / prime B.
    grid_len = max(2, _cdiv(B, bt))
    B_pad = grid_len * bt

    # Lane-dense layouts (wrapper-side reshape glue, no compute hoisted).
    x_flat = x.reshape(B, C * HW)
    rand = jax.random.uniform(key, (B, HW), dtype=jnp.float32)
    if B_pad != B:
        x_flat = jnp.pad(x_flat, ((0, B_pad - B), (0, 0)))
        rand = jnp.pad(rand, ((0, B_pad - B), (0, 0)))

    # Interior mask over the flattened padded plane (border = 0).
    mask = jnp.zeros((H, W), jnp.float32).at[1:-1, 1:-1].set(1.0).reshape(1, HW)

    out = pl.pallas_call(
        functools.partial(_random_model_kernel, num_channels=C, plane=HW),
        out_shape=jax.ShapeDtypeStruct((B_pad, HW), jnp.float32),
        grid=(grid_len,),
        in_specs=[
            pl.BlockSpec((1, HW), lambda i: (0, 0)),         # border mask (shared)
            pl.BlockSpec((bt, C * HW), lambda i: (i, 0)),    # flattened x
            pl.BlockSpec((bt, HW), lambda i: (i, 0)),        # uniforms
        ],
        out_specs=pl.BlockSpec((bt, HW), lambda i: (i, 0)),
        compiler_params=pltpu.CompilerParams(
            dimension_semantics=("parallel",),
        ),
    )(mask, x_flat, rand)

    # Drop batch padding, then interior extraction + .view(-1, bs**2) equivalent.
    return out[:B].reshape(B, H, W)[:, 1:-1, 1:-1].reshape(B, bs * bs)


if __name__ == "__main__":
    board_size = 14                      # padded input plane is 16 x 16
    B, C = 2, 4
    H = W = board_size + 2

    root = jax.random.PRNGKey(0)
    kx, krand = jax.random.split(root)
    # binary-ish occupancy planes, like a hex board encoding
    x = (jax.random.uniform(kx, (B, C, H, W)) > 0.8).astype(jnp.float32)

    y = random_model_forward(x, krand, board_size=board_size)
    jax.block_until_ready(y)

    assert y.shape == (B, board_size * board_size)
    assert y.dtype == jnp.float32

    # Pure-JAX reference using the exact same uniforms (same key, same (B, H*W)
    # draw as the wrapper; interior positions only).
    rand_full = jax.random.uniform(krand, (B, H * W), dtype=jnp.float32)
    rand_ref = rand_full.reshape(B, H, W)[:, 1:-1, 1:-1].reshape(B, -1)
    xs = jnp.sum(x[:, :, 1:-1, 1:-1], axis=1).reshape(B, -1)
    f = jnp.exp(jnp.tanh((jnp.sum(xs, axis=1, keepdims=True) - 1.0) * 1000.0) * 10.0)
    ref = rand_ref - (xs * f - xs)
    assert bool(jnp.allclose(y, ref, rtol=1e-4, atol=1e-3)), "mismatch vs reference"

    print("KERNEL_OK")
</pallas_src>

<mosaic_0001>
module attributes {stable_mosaic.version = 11 : i64} {
  func.func @_random_model_kernel(%arg0: i32, %arg1: memref<1x256xf32, #tpu.memory_space<vmem>>, %arg2: memref<8x1024xf32, #tpu.memory_space<vmem>>, %arg3: memref<8x256xf32, #tpu.memory_space<vmem>>, %arg4: memref<8x256xf32, #tpu.memory_space<vmem>>) attributes {dimension_semantics = [#tpu.dimension_semantics<parallel>], iteration_bounds = array<i64: 2>, scalar_prefetch = 0 : i64, scratch_operands = 0 : i64, tpu.core_type = #tpu.core_type<tc>, window_params = [{pipeline_mode = #tpu.pipeline_mode<synchronous>, transform_indices = @transform_0, window_bounds = array<i64: 1, 256>}, {transform_indices = @transform_1, window_bounds = array<i64: 8, 1024>}, {transform_indices = @transform_2, window_bounds = array<i64: 8, 256>}, {transform_indices = @transform_3, window_bounds = array<i64: 8, 256>}]} {
    %c0 = arith.constant 0 : index
    %c0_0 = arith.constant 0 : index
    %0 = vector.load %arg2[%c0, %c0_0] : memref<8x1024xf32, #tpu.memory_space<vmem>>, vector<8x1024xf32>
    %1 = vector.extract_strided_slice %0 {offsets = [0, 0], sizes = [8, 256], strides = [1, 1]} : vector<8x1024xf32> to vector<8x256xf32>
    %2 = vector.extract_strided_slice %0 {offsets = [0, 256], sizes = [8, 256], strides = [1, 1]} : vector<8x1024xf32> to vector<8x256xf32>
    %3 = arith.addf %1, %2 : vector<8x256xf32>
    %4 = vector.extract_strided_slice %0 {offsets = [0, 512], sizes = [8, 256], strides = [1, 1]} : vector<8x1024xf32> to vector<8x256xf32>
    %5 = arith.addf %3, %4 : vector<8x256xf32>
    %6 = vector.extract_strided_slice %0 {offsets = [0, 768], sizes = [8, 256], strides = [1, 1]} : vector<8x1024xf32> to vector<8x256xf32>
    %7 = arith.addf %5, %6 : vector<8x256xf32>
    %c0_1 = arith.constant 0 : index
    %c0_2 = arith.constant 0 : index
    %8 = vector.load %arg1[%c0_1, %c0_2] : memref<1x256xf32, #tpu.memory_space<vmem>>, vector<1x256xf32>
    %9 = vector.broadcast %8 : vector<1x256xf32> to vector<8x256xf32>
    %10 = arith.mulf %7, %9 : vector<8x256xf32>
    %cst = arith.constant dense<0.000000e+00> : vector<8xf32>
    %11 = vector.multi_reduction <add>, %10, %cst [1] : vector<8x256xf32> to vector<8xf32>
    %12 = vector.shape_cast %11 : vector<8xf32> to vector<8x1xf32>
    %cst_3 = arith.constant 1.000000e+00 : f32
    %13 = vector.broadcast %cst_3 : f32 to vector<8x1xf32>
    %14 = arith.subf %12, %13 : vector<8x1xf32>
    %cst_4 = arith.constant 1.000000e+03 : f32
    %15 = vector.broadcast %cst_4 : f32 to vector<8x1xf32>
    %16 = arith.mulf %14, %15 : vector<8x1xf32>
    %17 = math.tanh %16 : vector<8x1xf32>
    %cst_5 = arith.constant 1.000000e+01 : f32
    %18 = vector.broadcast %cst_5 : f32 to vector<8x1xf32>
    %19 = arith.mulf %17, %18 : vector<8x1xf32>
    %20 = math.exp %19 : vector<8x1xf32>
    %c0_6 = arith.constant 0 : index
    %c0_7 = arith.constant 0 : index
    %21 = vector.load %arg3[%c0_6, %c0_7] : memref<8x256xf32, #tpu.memory_space<vmem>>, vector<8x256xf32>
    %cst_8 = arith.constant 1.000000e+00 : f32
    %22 = vector.broadcast %cst_8 : f32 to vector<8x1xf32>
    %23 = arith.subf %20, %22 : vector<8x1xf32>
    %24 = vector.broadcast %23 : vector<8x1xf32> to vector<8x256xf32>
    %25 = arith.mulf %10, %24 : vector<8x256xf32>
    %26 = arith.subf %21, %25 : vector<8x256xf32>
    %c0_9 = arith.constant 0 : index
    %c0_10 = arith.constant 0 : index
    %27 = vector.load %arg4[%c0_9, %c0_10] : memref<8x256xf32, #tpu.memory_space<vmem>>, vector<8x256xf32>
    tpu.vector_store %arg4[%c0_9, %c0_10], %26 {strides = array<i32>} : memref<8x256xf32, #tpu.memory_space<vmem>>, vector<8x256xf32>,
    return
  }
  func.func @transform_0(%arg0: i32) -> (i32, i32) {
    %c0_i32 = arith.constant 0 : i32
    %c0_i32_0 = arith.constant 0 : i32
    %c0_i32_1 = arith.constant 0 : i32
    return %c0_i32, %c0_i32_0 : i32, i32
  }
  func.func @transform_1(%arg0: i32) -> (i32, i32) {
    %c0_i32 = arith.constant 0 : i32
    %c0_i32_0 = arith.constant 0 : i32
    return %arg0, %c0_i32 : i32, i32
  }
  func.func @transform_2(%arg0: i32) -> (i32, i32) {
    %c0_i32 = arith.constant 0 : i32
    %c0_i32_0 = arith.constant 0 : i32
    return %arg0, %c0_i32 : i32, i32
  }
  func.func @transform_3(%arg0: i32) -> (i32, i32) {
    %c0_i32 = arith.constant 0 : i32
    %c0_i32_0 = arith.constant 0 : i32
    return %arg0, %c0_i32 : i32, i32
  }
}

</mosaic_0001>

<llo_original>
// kernel: random_model_forward.1
$region0: #{random_model_forward.1}
  #allocation0 [shape = 'u32[]', space=smem, size = 0x4, offset = 0x4, fixed_abs, tag = 'smem constant byte address 0x4 - core index']
  #allocation1 [shape = 'u32[72,128]{1,0:T(1,128)}', space=vmem, size = 0x9000, scoped, tag = 'internal scratch']
  %s0 = inlined_call_operand.vmem [shape: f32[1,256], index: 0, kind: input, shape index: {}]
  %s1 = inlined_call_operand.vmem [shape: f32[16,1024], index: 1, kind: input, shape index: {}]
  %s2 = inlined_call_operand.vmem [shape: f32[16,256], index: 2, kind: input, shape index: {}]
  %s3 = inlined_call_operand.vmem [shape: f32[16,256], index: 3, kind: output, shape index: {}]
  %s4 = sld [smem:[#allocation0]]
  $region45: #{random_model_forward.1} parent=0
    _
  %s6 = ssub.s32 1, %s4
  %s7 = scalar_select 0, %s6, %s4
  loop: start=0, step=1, limit=4
  $region2: #{random_model_forward.1} parent=0 // loop_pre_header
    _
  $region3: #{random_model_forward.1} parent=0 // loop_header
    %s9 = sphi 0, %s13
    %p10 = scmp.ge.s32.totalorder %s9, 4
    %s17 = sphi 0, %s17
    %s19 = sphi 0, %s17
    %s20 = sphi 0, %s19
    %s34 = sphi 0, %s20
    %s40 = sphi 0, %s42
    %s43 = sphi 0, %s40
    %s44 = sphi 0, %s43
    %s60 = sphi 0, %s44
    %s66 = sphi 0, %s68
    %s69 = sphi 0, %s66
    %s70 = sphi 0, %s69
    %s86 = sphi 0, %s70
    %s92 = sphi 0, %s94
    %s95 = sphi 0, %s92
    %s96 = sphi 0, %s95
    %s112 = sphi 0, %s96
  $region4: #{random_model_forward.1} parent=0 // loop_header_branch
    %12 = sbr.rel (%p10) target = $region8
  $region5: #{random_model_forward.1} parent=0 // loop_body
    %s14 = ssub.s32 %s9, 1
    %s15 = ssub.s32 %s9, 2
    %s16 = sadd.s32 %s9, 1
    %s18 = sadd.s32 %s17, 1
    %p21 = scmp.eq.s32.totalorder %s9, 1
    %p22 = scmp.ne.s32.totalorder %s17, %s19
    %p23 = scmp.eq.s32.totalorder %s9, 0
    %p24 = por %p22, %p23
    %p25 = scmp.ne.s32.totalorder %s17, %s19
    %p26 = scmp.eq.s32.totalorder %s14, 1
    %p27 = por %p25, %p26
    %p28 = scmp.ne.s32.totalorder %s19, %s20
    %p29 = scmp.eq.s32.totalorder %s14, 0
    %p30 = por %p28, %p29
    %p31 = scmp.ne.s32.totalorder %s19, %s20
    %p32 = scmp.eq.s32.totalorder %s15, 1
    %p33 = por %p31, %p32
    %p35 = scmp.ne.s32.totalorder %s20, %s34
    %p36 = scmp.eq.s32.totalorder %s15, 0
    %p37 = por %p35, %p36
    %s38 = ssub.s32 %s9, %s16
    %p39 = scmp.eq.s32.totalorder %s38, 0
    %s41 = sadd.s32 %s40, 1
    %s42 = scalar_select %p39, %s40, %s41
    %p45 = pneg %p39
    %p46 = scmp.eq.s32.totalorder %s9, 1
    %p47 = por %p45, %p46
    %p48 = scmp.ne.s32.totalorder %s40, %s43
    %p49 = scmp.eq.s32.totalorder %s9, 0
    %p50 = por %p48, %p49
    %p51 = scmp.ne.s32.totalorder %s40, %s43
    %p52 = scmp.eq.s32.totalorder %s14, 1
    %p53 = por %p51, %p52
    %p54 = scmp.ne.s32.totalorder %s43, %s44
    %p55 = scmp.eq.s32.totalorder %s14, 0
    %p56 = por %p54, %p55
    %p57 = scmp.ne.s32.totalorder %s43, %s44
    %p58 = scmp.eq.s32.totalorder %s15, 1
    %p59 = por %p57, %p58
    %p61 = scmp.ne.s32.totalorder %s44, %s60
    %p62 = scmp.eq.s32.totalorder %s15, 0
    %p63 = por %p61, %p62
    %s64 = ssub.s32 %s9, %s16
    %p65 = scmp.eq.s32.totalorder %s64, 0
    %s67 = sadd.s32 %s66, 1
    %s68 = scalar_select %p65, %s66, %s67
    %p71 = pneg %p65
    %p72 = scmp.eq.s32.totalorder %s9, 1
    %p73 = por %p71, %p72
    %p74 = scmp.ne.s32.totalorder %s66, %s69
    %p75 = scmp.eq.s32.totalorder %s9, 0
    %p76 = por %p74, %p75
    %p77 = scmp.ne.s32.totalorder %s66, %s69
    %p78 = scmp.eq.s32.totalorder %s14, 1
    %p79 = por %p77, %p78
    %p80 = scmp.ne.s32.totalorder %s69, %s70
    %p81 = scmp.eq.s32.totalorder %s14, 0
    %p82 = por %p80, %p81
    %p83 = scmp.ne.s32.totalorder %s69, %s70
    %p84 = scmp.eq.s32.totalorder %s15, 1
    %p85 = por %p83, %p84
    %p87 = scmp.ne.s32.totalorder %s70, %s86
    %p88 = scmp.eq.s32.totalorder %s15, 0
    %p89 = por %p87, %p88
    %s90 = ssub.s32 %s9, %s16
    %p91 = scmp.eq.s32.totalorder %s90, 0
    %s93 = sadd.s32 %s92, 1
    %s94 = scalar_select %p91, %s92, %s93
    %p97 = pneg %p91
    %p98 = scmp.eq.s32.totalorder %s9, 1
    %p99 = por %p97, %p98
    %p100 = scmp.ne.s32.totalorder %s92, %s95
    %p101 = scmp.eq.s32.totalorder %s9, 0
    %p102 = por %p100, %p101
    %p103 = scmp.ne.s32.totalorder %s92, %s95
    %p104 = scmp.eq.s32.totalorder %s14, 1
    %p105 = por %p103, %p104
    %p106 = scmp.ne.s32.totalorder %s95, %s96
    %p107 = scmp.eq.s32.totalorder %s14, 0
    %p108 = por %p106, %p107
    %p109 = scmp.ne.s32.totalorder %s95, %s96
    %p110 = scmp.eq.s32.totalorder %s15, 1
    %p111 = por %p109, %p110
    %p113 = scmp.ne.s32.totalorder %s96, %s112
    %p114 = scmp.eq.s32.totalorder %s15, 0
    %p115 = por %p113, %p114
    %p116 = scmp.le.s32.totalorder 1, %s9
    %p117 = scmp.lt.s32.totalorder %s9, 3
    %p118 = pnand %p116, %p117
    %p119 = pneg %p118
    // Predicated region
    $region9: #{random_model_forward.1} parent=5 // pred_check
      _
    $region10: #{random_model_forward.1} parent=5 // pred_check_branch
      %121 = sbr.rel (%p118) target = $region12
    $region11: #{random_model_forward.1} parent=5 // pred_region
      %s122 = ssub.s32 %s9, 1
      // Predicated region
      $region13: #{random_model_forward.1} parent=11 // pred_check
        %p123 = pneg %p30
      $region14: #{random_model_forward.1} parent=11 // pred_check_branch
        %125 = sbr.rel (%p123) target = $region16
      $region15: #{random_model_forward.1} parent=11 // pred_region
        _
      $region16: #{random_model_forward.1} parent=11 // pred_fallthru
        _
    $region12: #{random_model_forward.1} parent=5 // pred_fallthru
      _
    %p126 = scmp.lt.s32.totalorder %s9, 2
    // Predicated region
    $region17: #{random_model_forward.1} parent=5 // pred_check
      %p127 = pneg %p126
    $region18: #{random_model_forward.1} parent=5 // pred_check_branch
      %129 = sbr.rel (%p127) target = $region20
    $region19: #{random_model_forward.1} parent=5 // pred_region
      // Predicated region
      $region21: #{random_model_forward.1} parent=19 // pred_check
        %p130 = pneg %p50
      $region22: #{random_model_forward.1} parent=19 // pred_check_branch
        %132 = sbr.rel (%p130) target = $region24
      $region23: #{random_model_forward.1} parent=19 // pred_region
        %p133 = scmp.lt.s32.totalorder %s9, 1
        %s134 = scalar_select %p133, %s9, 1
        %s135 = smul.addr %s134, 8
        %s136 = smul.addr %s135, 8
        %s137 = scalar_lea.vmem %s1, %s136
      $region24: #{random_model_forward.1} parent=19 // pred_fallthru
        _
      // Predicated region
      $region25: #{random_model_forward.1} parent=19 // pred_check
        %p138 = pneg %p76
      $region26: #{random_model_forward.1} parent=19 // pred_check_branch
        %140 = sbr.rel (%p138) target = $region28
      $region27: #{random_model_forward.1} parent=19 // pred_region
        %p141 = scmp.lt.s32.totalorder %s9, 1
        %s142 = scalar_select %p141, %s9, 1
        %s143 = smul.addr %s142, 2
        %s144 = smul.addr %s143, 8
        %s145 = scalar_lea.vmem %s2, %s144
      $region28: #{random_model_forward.1} parent=19 // pred_fallthru
        _
    $region20: #{random_model_forward.1} parent=5 // pred_fallthru
      _
    %p146 = scmp.le.s32.totalorder 1, %s9
    %p147 = scmp.lt.s32.totalorder %s9, 3
    %p148 = pnand %p146, %p147
    %p149 = pneg %p148
    // Predicated region
    $region29: #{random_model_forward.1} parent=5 // pred_check
      _
    $region30: #{random_model_forward.1} parent=5 // pred_check_branch
      %151 = sbr.rel (%p148) target = $region32
    $region31: #{random_model_forward.1} parent=5 // pred_region
      %s152 = ssub.s32 %s9, 1
      %p153 = pneg %p30
      %p154 = pneg %p27
      %p155 = scmp.lt.s32.totalorder %s14, 1
      %s156 = scalar_select %p155, %s14, 1
      %s157 = smul.addr %s156, 8
      %s158 = smul.addr %s157, 8
      %s159 = scalar_lea.vmem %s1, %s158
      %p160 = pneg %p56
      %p161 = pneg %p53
      %p162 = scmp.lt.s32.totalorder %s14, 1
      %s163 = scalar_select %p162, %s14, 1
      %s164 = smul.addr %s163, 2
      %s165 = smul.addr %s164, 8
      %s166 = scalar_lea.vmem %s2, %s165
      %p167 = pneg %p82
      %p168 = pneg %p79
      %p169 = pneg %p108
      %p170 = pneg %p105
      %p171 = scmp.lt.s32.totalorder %s14, 1
      %s172 = scalar_select %p171, %s14, 1
      %s173 = smul.addr %s172, 2
      %s174 = smul.addr %s173, 8
      %s175 = scalar_lea.vmem %s3, %s174
      %p176 = scmp.lt.s32.totalorder %s14, 1
      %s177 = scalar_select %p176, %s14, 1
      %s178 = smul.addr %s177, 8
      %s179 = smul.addr %s178, 8
      %s180 = scalar_lea.vmem %s1, %s179
      %p181 = scmp.lt.s32.totalorder %s14, 1
      %s182 = scalar_select %p181, %s14, 1
      %s183 = smul.addr %s182, 2
      %s184 = smul.addr %s183, 8
      %s185 = scalar_lea.vmem %s2, %s184
      %p186 = scmp.lt.s32.totalorder %s14, 1
      %s187 = scalar_select %p186, %s14, 1
      %s188 = smul.addr %s187, 2
      %s189 = smul.addr %s188, 8
      %s190 = scalar_lea.vmem %s3, %s189
      %v191 = vld [vmem:[%s180] sm:$0xff]
      %v192 = vld [vmem:[%s180 + $0x8] sm:$0xff]
      %v193 = vld [vmem:[%s180 + $0x10] sm:$0xff]
      %v194 = vld [vmem:[%s180 + $0x18] sm:$0xff]
      %v195 = vld [vmem:[%s180 + $0x20] sm:$0xff]
      %v196 = vld [vmem:[%s180 + $0x28] sm:$0xff]
      %v197 = vld [vmem:[%s180 + $0x30] sm:$0xff]
      %v198 = vld [vmem:[%s180 + $0x38] sm:$0xff]
      %v199 = vadd.f32 %v191, %v193
      %v200 = vadd.f32 %v192, %v194
      %v201 = vadd.f32 %v199, %v195
      %v202 = vadd.f32 %v200, %v196
      %v203 = vadd.f32 %v201, %v197
      %v204 = vadd.f32 %v202, %v198
      %v205 = vld [vmem:[%s0] sm:$0x3]
      %v207 = vperm.slane %v205, 0
      %v208 = vperm.slane %v205, 1
      %v211 = vmul.f32 %v203, %v207
      %v212 = vmul.f32 %v204, %v208
      %v213 = vadd.f32 %v211, %v212
      %214 = vadd.xlane.f32.xlu0 %v213
      %v215 = vpop.xlane.xlu0 %214
      %v216 = vsub.f32 %v215, 1.0
      %v217 = vmul.f32 %v216, 1000.0
      %v218 = vtanh.pop %v217
      %v219 = vmul.f32 %v218, 10.0
      %v220 = vmul.f32 %v219, 1.442695
      %v221 = vpow.pop %v220
      %v222 = vld [vmem:[%s185] sm:$0xff]
      %v223 = vld [vmem:[%s185 + $0x8] sm:$0xff]
      %v224 = vsub.f32 %v221, 1.0
      %v225 = vmul.f32 %v211, %v224
      %v226 = vmul.f32 %v212, %v224
      %v227 = vsub.f32 %v222, %v225
      %v228 = vsub.f32 %v223, %v226
      %229 = vst [vmem:[%s190] sm:$0xff] %v227
      %230 = vst [vmem:[%s190 + $0x8] sm:$0xff] %v228
      %p231 = scmp.lt.s32.totalorder %s14, 1
      %s232 = scalar_select %p231, %s14, 1
      %s233 = smul.addr %s232, 2
      %s234 = smul.addr %s233, 8
      %s235 = scalar_lea.vmem %s3, %s234
      // Predicated region
      $region33: #{random_model_forward.1} parent=31 // pred_check
        %p236 = pneg %p105
      $region34: #{random_model_forward.1} parent=31 // pred_check_branch
        %238 = sbr.rel (%p236) target = $region36
      $region35: #{random_model_forward.1} parent=31 // pred_region
        _
      $region36: #{random_model_forward.1} parent=31 // pred_fallthru
        _
    $region32: #{random_model_forward.1} parent=5 // pred_fallthru
      _
    %p239 = scmp.le.s32.totalorder 2, %s9
    // Predicated region
    $region37: #{random_model_forward.1} parent=5 // pred_check
      %p240 = pneg %p239
    $region38: #{random_model_forward.1} parent=5 // pred_check_branch
      %242 = sbr.rel (%p240) target = $region40
    $region39: #{random_model_forward.1} parent=5 // pred_region
      %s243 = ssub.s32 %s9, 2
      // Predicated region
      $region41: #{random_model_forward.1} parent=39 // pred_check
        %p244 = pneg %p111
      $region42: #{random_model_forward.1} parent=39 // pred_check_branch
        %246 = sbr.rel (%p244) target = $region44
      $region43: #{random_model_forward.1} parent=39 // pred_region
        %p247 = scmp.lt.s32.totalorder %s15, 1
        %s248 = scalar_select %p247, %s15, 1
        %s249 = smul.addr %s248, 2
        %s250 = smul.addr %s249, 8
        %s251 = scalar_lea.vmem %s3, %s250
      $region44: #{random_model_forward.1} parent=39 // pred_fallthru
        _
    $region40: #{random_model_forward.1} parent=5 // pred_fallthru
      _
  $region6: #{random_model_forward.1} parent=0 // loop_footer
    %s13 = sadd.s32 1, %s9
  $region7: #{random_model_forward.1} parent=0 // loop_footer_branch
    %8 = sbr.rel target = $region3
  $region8: #{random_model_forward.1} parent=0 // loop_exit
    _

</llo_original>
